<compile_context>
chip_gen: v7x
topology: tpu7x:2x2x1
jax: 0.10.0
libtpu: 0.0.40
codegen_flags: <defaults>
</compile_context>

<pallas_src>
import jax
import jax.numpy as jnp
from jax import lax
from jax.experimental import pallas as pl
from jax.experimental.pallas import tpu as pltpu


def _mlp_kernel(x_ref, w1_ref, b1_ref, w2_ref, b2_ref, w3_ref, b3_ref, o_ref):
    # x_ref: (TILE_B, F) ; weights in PyTorch (out, in) layout ; biases (out, 1)
    x = x_ref[...]

    # h1^T = W1 @ x^T  — contract both operands on their minor (feature) dim.
    h1 = lax.dot_general(
        w1_ref[...], x,
        dimension_numbers=(((1,), (1,)), ((), ())),
        preferred_element_type=jnp.float32,
    )                                                   # (16, TILE_B), lane-dense
    h1 = jnp.maximum(h1 + b1_ref[...], 0.0)             # bias broadcast over lanes + ReLU

    h2 = jnp.dot(w2_ref[...], h1,
                 preferred_element_type=jnp.float32)    # (8, TILE_B)
    h2 = jnp.maximum(h2 + b2_ref[...], 0.0)

    z = jnp.dot(w3_ref[...], h2,
                preferred_element_type=jnp.float32)     # (1, TILE_B)
    z = z + b3_ref[...]

    o_ref[...] = jax.nn.sigmoid(z).astype(o_ref.dtype)  # unmasked full-lane store


def fraud_detection_forward(x, params, *, tile_b_max=8192):
    """Fused MLP forward pass as a single batch-tiled Pallas kernel.

    x: (B, input_size) float32
    params: PyTorch-layout params: w1 (16,F), b1 (16,), w2 (8,16), b2 (8,), w3 (1,8), b3 (1,)
    returns: (B, 1) float32 probabilities
    """
    B, F = x.shape
    w1, b1 = params["w1"], params["b1"]
    w2, b2 = params["w2"], params["b2"]
    w3, b3 = params["w3"], params["b3"]

    # Biases as (out, 1) columns so they broadcast over the lane (batch) axis.
    b1c = b1.reshape(16, 1).astype(jnp.float32)
    b2c = b2.reshape(8, 1).astype(jnp.float32)
    b3c = b3.reshape(1, 1).astype(jnp.float32)

    # Batch tile: large (up to 8192 rows) for HBM-roofline DMA; multiple of 128 so the
    # batch maps cleanly onto the 128-lane axis of the transposed intermediates.
    if B >= tile_b_max:
        tile_b = tile_b_max
    else:
        tile_b = max(128, pl.cdiv(B, 128) * 128)
    n_tiles = pl.cdiv(B, tile_b)
    b_pad = n_tiles * tile_b
    x_in = x if b_pad == B else jnp.pad(x, ((0, b_pad - B), (0, 0)))

    const2 = lambda i: (0, 0)  # weights/biases: same block every grid step (resident)

    out = pl.pallas_call(
        _mlp_kernel,
        out_shape=jax.ShapeDtypeStruct((1, b_pad), jnp.float32),
        grid=(n_tiles,),
        in_specs=[
            pl.BlockSpec((tile_b, F), lambda i: (i, 0)),   # x: tiled over batch
            pl.BlockSpec(w1.shape, const2),
            pl.BlockSpec((16, 1), const2),
            pl.BlockSpec(w2.shape, const2),
            pl.BlockSpec((8, 1), const2),
            pl.BlockSpec(w3.shape, const2),
            pl.BlockSpec((1, 1), const2),
        ],
        # Lane-dense output: (1, TILE_B) block tiling the (1, B_pad) result.
        out_specs=pl.BlockSpec((1, tile_b), lambda i: (0, i)),
        compiler_params=pltpu.CompilerParams(
            dimension_semantics=("parallel",),
        ),
    )(x_in, w1, b1c, w2, b2c, w3, b3c)

    # (1, B_pad) -> (B, 1), dropping padded rows.
    return out.reshape(b_pad, 1)[:B]


def init_params(input_size: int, key):
    """Deterministic init mirroring nn.Linear (weights in (out_features, in_features))."""
    k1, k2, k3, k4, k5, k6 = jax.random.split(key, 6)
    s1 = 1.0 / jnp.sqrt(jnp.float32(input_size))
    s2 = 1.0 / jnp.sqrt(jnp.float32(16))
    s3 = 1.0 / jnp.sqrt(jnp.float32(8))
    return {
        "w1": jax.random.uniform(k1, (16, input_size), jnp.float32, -s1, s1),
        "b1": jax.random.uniform(k2, (16,), jnp.float32, -s1, s1),
        "w2": jax.random.uniform(k3, (8, 16), jnp.float32, -s2, s2),
        "b2": jax.random.uniform(k4, (8,), jnp.float32, -s2, s2),
        "w3": jax.random.uniform(k5, (1, 8), jnp.float32, -s3, s3),
        "b3": jax.random.uniform(k6, (1,), jnp.float32, -s3, s3),
    }


def reference_forward(x, p):
    h1 = jnp.maximum(x @ p["w1"].T + p["b1"], 0.0)
    h2 = jnp.maximum(h1 @ p["w2"].T + p["b2"], 0.0)
    return jax.nn.sigmoid(h2 @ p["w3"].T + p["b3"])


if __name__ == "__main__":
    key = jax.random.PRNGKey(0)
    k_x, k_p = jax.random.split(key)

    batch, input_size = 8, 32
    x = jax.random.normal(k_x, (batch, input_size), dtype=jnp.float32)
    params = init_params(input_size, k_p)

    out = jax.block_until_ready(fraud_detection_forward(x, params))
    ref = reference_forward(x, params)

    assert out.shape == (batch, 1)
    assert jnp.allclose(out, ref, atol=1e-5, rtol=1e-5)

    print("KERNEL_OK")
</pallas_src>

<mosaic_0001>
module attributes {stable_mosaic.version = 11 : i64} {
  func.func @_mlp_kernel(%arg0: i32, %arg1: memref<128x32xf32, #tpu.memory_space<vmem>>, %arg2: memref<16x32xf32, #tpu.memory_space<vmem>>, %arg3: memref<16x1xf32, #tpu.memory_space<vmem>>, %arg4: memref<8x16xf32, #tpu.memory_space<vmem>>, %arg5: memref<8x1xf32, #tpu.memory_space<vmem>>, %arg6: memref<1x8xf32, #tpu.memory_space<vmem>>, %arg7: memref<1x1xf32, #tpu.memory_space<vmem>>, %arg8: memref<1x128xf32, #tpu.memory_space<vmem>>) attributes {dimension_semantics = [#tpu.dimension_semantics<parallel>], iteration_bounds = array<i64: 1>, scalar_prefetch = 0 : i64, scratch_operands = 0 : i64, tpu.core_type = #tpu.core_type<tc>, window_params = [{transform_indices = @transform_0, window_bounds = array<i64: 128, 32>}, {pipeline_mode = #tpu.pipeline_mode<synchronous>, transform_indices = @transform_1, window_bounds = array<i64: 16, 32>}, {pipeline_mode = #tpu.pipeline_mode<synchronous>, transform_indices = @transform_2, window_bounds = array<i64: 16, 1>}, {pipeline_mode = #tpu.pipeline_mode<synchronous>, transform_indices = @transform_3, window_bounds = array<i64: 8, 16>}, {pipeline_mode = #tpu.pipeline_mode<synchronous>, transform_indices = @transform_4, window_bounds = array<i64: 8, 1>}, {pipeline_mode = #tpu.pipeline_mode<synchronous>, transform_indices = @transform_5, window_bounds = array<i64: 1, 8>}, {pipeline_mode = #tpu.pipeline_mode<synchronous>, transform_indices = @transform_6, window_bounds = array<i64: 1, 1>}, {transform_indices = @transform_7, window_bounds = array<i64: 1, 128>}]} {
    %c0 = arith.constant 0 : index
    %c0_0 = arith.constant 0 : index
    %0 = vector.load %arg1[%c0, %c0_0] : memref<128x32xf32, #tpu.memory_space<vmem>>, vector<128x32xf32>
    %c0_1 = arith.constant 0 : index
    %c0_2 = arith.constant 0 : index
    %1 = vector.load %arg2[%c0_1, %c0_2] : memref<16x32xf32, #tpu.memory_space<vmem>>, vector<16x32xf32>
    %cst = arith.constant dense<0.000000e+00> : vector<16x128xf32>
    %2 = tpu.matmul %1, %0, %cst {dimension_numbers = #tpu.dot_dimension_numbers<[1], [1], [0], [0], [0, 0, 1, 0], [], []>} : vector<16x32xf32>, vector<128x32xf32>, vector<16x128xf32> -> vector<16x128xf32>
    %c0_3 = arith.constant 0 : index
    %c0_4 = arith.constant 0 : index
    %3 = vector.load %arg3[%c0_3, %c0_4] : memref<16x1xf32, #tpu.memory_space<vmem>>, vector<16x1xf32>
    %4 = vector.broadcast %3 : vector<16x1xf32> to vector<16x128xf32>
    %5 = arith.addf %2, %4 : vector<16x128xf32>
    %cst_5 = arith.constant 0.000000e+00 : f32
    %6 = vector.broadcast %cst_5 : f32 to vector<16x128xf32>
    %7 = arith.maximumf %5, %6 : vector<16x128xf32>
    %c0_6 = arith.constant 0 : index
    %c0_7 = arith.constant 0 : index
    %8 = vector.load %arg4[%c0_6, %c0_7] : memref<8x16xf32, #tpu.memory_space<vmem>>, vector<8x16xf32>
    %cst_8 = arith.constant dense<0.000000e+00> : vector<8x128xf32>
    %9 = tpu.matmul %8, %7, %cst_8 {dimension_numbers = #tpu.dot_dimension_numbers<[1], [0], [0], [1], [0, 0, 1, 1], [], []>} : vector<8x16xf32>, vector<16x128xf32>, vector<8x128xf32> -> vector<8x128xf32>
    %c0_9 = arith.constant 0 : index
    %c0_10 = arith.constant 0 : index
    %10 = vector.load %arg5[%c0_9, %c0_10] : memref<8x1xf32, #tpu.memory_space<vmem>>, vector<8x1xf32>
    %11 = vector.broadcast %10 : vector<8x1xf32> to vector<8x128xf32>
    %12 = arith.addf %9, %11 : vector<8x128xf32>
    %cst_11 = arith.constant 0.000000e+00 : f32
    %13 = vector.broadcast %cst_11 : f32 to vector<8x128xf32>
    %14 = arith.maximumf %12, %13 : vector<8x128xf32>
    %c0_12 = arith.constant 0 : index
    %c0_13 = arith.constant 0 : index
    %15 = vector.load %arg6[%c0_12, %c0_13] : memref<1x8xf32, #tpu.memory_space<vmem>>, vector<1x8xf32>
    %cst_14 = arith.constant dense<0.000000e+00> : vector<1x128xf32>
    %16 = tpu.matmul %15, %14, %cst_14 {dimension_numbers = #tpu.dot_dimension_numbers<[1], [0], [0], [1], [0, 0, 1, 1], [], []>} : vector<1x8xf32>, vector<8x128xf32>, vector<1x128xf32> -> vector<1x128xf32>
    %c0_15 = arith.constant 0 : index
    %c0_16 = arith.constant 0 : index
    %17 = vector.load %arg7[%c0_15, %c0_16] : memref<1x1xf32, #tpu.memory_space<vmem>>, vector<1x1xf32>
    %18 = vector.broadcast %17 : vector<1x1xf32> to vector<1x128xf32>
    %19 = arith.addf %16, %18 : vector<1x128xf32>
    %20 = arith.negf %19 : vector<1x128xf32>
    %21 = math.exp %20 : vector<1x128xf32>
    %cst_17 = arith.constant 1.000000e+00 : f32
    %22 = vector.broadcast %cst_17 : f32 to vector<1x128xf32>
    %23 = arith.addf %22, %21 : vector<1x128xf32>
    %24 = arith.divf %22, %23 : vector<1x128xf32>
    %c0_18 = arith.constant 0 : index
    %c0_19 = arith.constant 0 : index
    %25 = vector.load %arg8[%c0_18, %c0_19] : memref<1x128xf32, #tpu.memory_space<vmem>>, vector<1x128xf32>
    tpu.vector_store %arg8[%c0_18, %c0_19], %24 {strides = array<i32>} : memref<1x128xf32, #tpu.memory_space<vmem>>, vector<1x128xf32>,
    return
  }
  func.func @transform_0(%arg0: i32) -> (i32, i32) {
    %c0_i32 = arith.constant 0 : i32
    %c0_i32_0 = arith.constant 0 : i32
    return %arg0, %c0_i32 : i32, i32
  }
  func.func @transform_1(%arg0: i32) -> (i32, i32) {
    %c0_i32 = arith.constant 0 : i32
    %c0_i32_0 = arith.constant 0 : i32
    %c0_i32_1 = arith.constant 0 : i32
    return %c0_i32, %c0_i32_0 : i32, i32
  }
  func.func @transform_2(%arg0: i32) -> (i32, i32) {
    %c0_i32 = arith.constant 0 : i32
    %c0_i32_0 = arith.constant 0 : i32
    %c0_i32_1 = arith.constant 0 : i32
    return %c0_i32, %c0_i32_0 : i32, i32
  }
  func.func @transform_3(%arg0: i32) -> (i32, i32) {
    %c0_i32 = arith.constant 0 : i32
    %c0_i32_0 = arith.constant 0 : i32
    %c0_i32_1 = arith.constant 0 : i32
    return %c0_i32, %c0_i32_0 : i32, i32
  }
  func.func @transform_4(%arg0: i32) -> (i32, i32) {
    %c0_i32 = arith.constant 0 : i32
    %c0_i32_0 = arith.constant 0 : i32
    %c0_i32_1 = arith.constant 0 : i32
    return %c0_i32, %c0_i32_0 : i32, i32
  }
  func.func @transform_5(%arg0: i32) -> (i32, i32) {
    %c0_i32 = arith.constant 0 : i32
    %c0_i32_0 = arith.constant 0 : i32
    %c0_i32_1 = arith.constant 0 : i32
    return %c0_i32, %c0_i32_0 : i32, i32
  }
  func.func @transform_6(%arg0: i32) -> (i32, i32) {
    %c0_i32 = arith.constant 0 : i32
    %c0_i32_0 = arith.constant 0 : i32
    %c0_i32_1 = arith.constant 0 : i32
    return %c0_i32, %c0_i32_0 : i32, i32
  }
  func.func @transform_7(%arg0: i32) -> (i32, i32) {
    %c0_i32 = arith.constant 0 : i32
    %c0_i32_0 = arith.constant 0 : i32
    return %c0_i32, %arg0 : i32, i32
  }
}

</mosaic_0001>

<llo_original>
// kernel: tpu_custom_call.1
$region0: #{tpu_custom_call.1}
  #allocation0 [shape = 'u32[]', space=smem, size = 0x4, offset = 0x4, fixed_abs, tag = 'smem constant byte address 0x4 - core index']
  #allocation1 [shape = 'u32[144,128]{1,0:T(1,128)}', space=vmem, size = 0x12000, scoped, tag = 'internal scratch']
  #allocation2 [shape = 'f32[1,1]{1,0:T(1,128)S(1)}', space=vmem, size = 0x200, scoped, tag = 'scoped memory for tpu_custom_call.1']
  %s0 = inlined_call_operand.vmem [shape: f32[128,32], index: 0, kind: input, shape index: {}]
  %s1 = inlined_call_operand.vmem [shape: f32[16,32], index: 1, kind: input, shape index: {}]
  %s2 = inlined_call_operand.vmem [shape: f32[16,1], index: 2, kind: input, shape index: {}]
  %s3 = inlined_call_operand.vmem [shape: f32[8,16], index: 3, kind: input, shape index: {}]
  %s4 = inlined_call_operand.vmem [shape: f32[8,1], index: 4, kind: input, shape index: {}]
  %s5 = inlined_call_operand.vmem [shape: f32[1,8], index: 5, kind: input, shape index: {}]
  %s6 = inlined_call_operand.<no memory space> [shape: f32[1,1], index: 6, kind: input, shape index: {}]
  %s7 = inlined_call_operand.hbm [shape: f32[1,128], index: 7, kind: output, shape index: {}]
  %s8 = sld [smem:[#allocation0]]
  $region38: #{tpu_custom_call.1} parent=0
    _
  %s10 = ssub.s32 1, %s8
  %s11 = scalar_select 0, %s10, %s8
  %v12 = vstv %s6
  %13 = vst [vmem:[#allocation2] sm:$0x1] %v12
  $region1: #{tpu_custom_call.1} parent=0
    #allocation3 [shape = 'u8[512]{0}', space=vmem, size = 0x400, scoped, tag = 'output window, operand 0, single buffered']
    #allocation4 [shape = 's32[1]{0}', space=sflag, size = 0x4, scoped, tag = 'scoped memory for tpu_custom_call.1']
    %14 = vsyncpa [#allocation4], 0
    // Predicated region
    $region2: #{tpu_custom_call.1} parent=1 // pred_check
      _
    $region3: #{tpu_custom_call.1} parent=1 // pred_check_branch
      %16 = sbr.rel (0) target = $region5
    $region4: #{tpu_custom_call.1} parent=1 // pred_region
      _
    $region5: #{tpu_custom_call.1} parent=1 // pred_fallthru
      _
    // Predicated region
    $region6: #{tpu_custom_call.1} parent=1 // pred_check
      _
    $region7: #{tpu_custom_call.1} parent=1 // pred_check_branch
      %18 = sbr.rel (0) target = $region9
    $region8: #{tpu_custom_call.1} parent=1 // pred_region
      _
    $region9: #{tpu_custom_call.1} parent=1 // pred_fallthru
      _
    // Predicated region
    $region10: #{tpu_custom_call.1} parent=1 // pred_check
      _
    $region11: #{tpu_custom_call.1} parent=1 // pred_check_branch
      %20 = sbr.rel (0) target = $region13
    $region12: #{tpu_custom_call.1} parent=1 // pred_region
      _
    $region13: #{tpu_custom_call.1} parent=1 // pred_fallthru
      _
    // Predicated region
    $region14: #{tpu_custom_call.1} parent=1 // pred_check
      _
    $region15: #{tpu_custom_call.1} parent=1 // pred_check_branch
      %22 = sbr.rel (0) target = $region17
    $region16: #{tpu_custom_call.1} parent=1 // pred_region
      _
    $region17: #{tpu_custom_call.1} parent=1 // pred_fallthru
      _
    // Predicated region
    $region18: #{tpu_custom_call.1} parent=1 // pred_check
      _
    $region19: #{tpu_custom_call.1} parent=1 // pred_check_branch
      %24 = sbr.rel (0) target = $region21
    $region20: #{tpu_custom_call.1} parent=1 // pred_region
      _
    $region21: #{tpu_custom_call.1} parent=1 // pred_fallthru
      _
    // Predicated region
    $region22: #{tpu_custom_call.1} parent=1 // pred_check
      _
    $region23: #{tpu_custom_call.1} parent=1 // pred_check_branch
      %26 = sbr.rel (0) target = $region25
    $region24: #{tpu_custom_call.1} parent=1 // pred_region
      _
    $region25: #{tpu_custom_call.1} parent=1 // pred_fallthru
      _
    // Predicated region
    $region26: #{tpu_custom_call.1} parent=1 // pred_check
      _
    $region27: #{tpu_custom_call.1} parent=1 // pred_check_branch
      %28 = sbr.rel (0) target = $region29
    $region28: #{tpu_custom_call.1} parent=1 // pred_region
      _
    $region29: #{tpu_custom_call.1} parent=1 // pred_fallthru
      _
    %v29 = vld [vmem:[%s0] sm:$0xff]
    %v30 = vld [vmem:[%s0 + $0x8] sm:$0xff]
    %v31 = vld [vmem:[%s0 + $0x10] sm:$0xff]
    %v32 = vld [vmem:[%s0 + $0x18] sm:$0xff]
    %v33 = vld [vmem:[%s0 + $0x20] sm:$0xff]
    %v34 = vld [vmem:[%s0 + $0x28] sm:$0xff]
    %v35 = vld [vmem:[%s0 + $0x30] sm:$0xff]
    %v36 = vld [vmem:[%s0 + $0x38] sm:$0xff]
    %v37 = vld [vmem:[%s0 + $0x40] sm:$0xff]
    %v38 = vld [vmem:[%s0 + $0x48] sm:$0xff]
    %v39 = vld [vmem:[%s0 + $0x50] sm:$0xff]
    %v40 = vld [vmem:[%s0 + $0x58] sm:$0xff]
    %v41 = vld [vmem:[%s0 + $0x60] sm:$0xff]
    %v42 = vld [vmem:[%s0 + $0x68] sm:$0xff]
    %v43 = vld [vmem:[%s0 + $0x70] sm:$0xff]
    %v44 = vld [vmem:[%s0 + $0x78] sm:$0xff]
    %v45 = vld [vmem:[%s1] sm:$0xff]
    %v46 = vld [vmem:[%s1 + $0x8] sm:$0xff]
    %v47 = vld [vmem:[%s2] sm:$0xff]
    %v48 = vld [vmem:[%s2 + $0x8] sm:$0xff]
    %50 = vset.pattern.permute.xlu0 0
    %51 = vperm.xlu0 %50, %v47
    %v52 = vpop.permute.xlu0 %51
    %55 = vset.pattern.permute.xlu0 0
    %56 = vperm.xlu0 %55, %v48
    %v57 = vpop.permute.xlu0 %56
    %vm59 = vcmask 261120
    %v61 = vsel %vm59, %v45, 0
    %v64 = vsel %vm59, %v46, 0
    %v67 = vsel %vm59, %v29, 0
    %v70 = vsel %vm59, %v30, 0
    %v73 = vsel %vm59, %v31, 0
    %v76 = vsel %vm59, %v32, 0
    %v79 = vsel %vm59, %v33, 0
    %v82 = vsel %vm59, %v34, 0
    %v85 = vsel %vm59, %v35, 0
    %v88 = vsel %vm59, %v36, 0
    %v91 = vsel %vm59, %v37, 0
    %v94 = vsel %vm59, %v38, 0
    %v97 = vsel %vm59, %v39, 0
    %v100 = vsel %vm59, %v40, 0
    %v103 = vsel %vm59, %v41, 0
    %v106 = vsel %vm59, %v42, 0
    %v109 = vsel %vm59, %v43, 0
    %v112 = vsel %vm59, %v44, 0
    %114 = vmatprep.subr.mxu0 0.0
    %115 = vmatpush1.xpose.msra.mxu0 %v67
    %116 = vmatprep.subr.mxu0 0.0
    %117 = vmatpush1.xpose.msra.mxu0 %v70
    %118 = vmatprep.subr.mxu0 0.0
    %119 = vmatpush1.xpose.msra.mxu0 %v73
    %120 = vmatprep.subr.mxu0 0.0
    %121 = vmatpush1.xpose.msra.mxu0 %v76
    %122 = vmatprep.subr.mxu0 0.0
    %123 = vmatpush1.xpose.msra.mxu0 %v79
    %124 = vmatprep.subr.mxu0 0.0
    %125 = vmatpush1.xpose.msra.mxu0 %v82
    %126 = vmatprep.subr.mxu0 0.0
    %127 = vmatpush1.xpose.msra.mxu0 %v85
    %128 = vmatprep.subr.mxu0 0.0
    %129 = vmatpush1.xpose.msra.mxu0 %v88
    %130 = vmatprep.subr.mxu0 0.0
    %131 = vmatpush1.xpose.msra.mxu0 %v91
    %132 = vmatprep.subr.mxu0 0.0
    %133 = vmatpush1.xpose.msra.mxu0 %v94
    %134 = vmatprep.subr.mxu0 0.0
    %135 = vmatpush1.xpose.msra.mxu0 %v97
    %136 = vmatprep.subr.mxu0 0.0
    %137 = vmatpush1.xpose.msra.mxu0 %v100
    %138 = vmatprep.subr.mxu0 0.0
    %139 = vmatpush1.xpose.msra.mxu0 %v103
    %140 = vmatprep.subr.mxu0 0.0
    %141 = vmatpush1.xpose.msra.mxu0 %v106
    %142 = vmatprep.subr.mxu0 0.0
    %143 = vmatpush1.xpose.msra.mxu0 %v109
    %144 = vmatprep.subr.mxu0 0.0
    %145 = vmatpush1.xpose.msra.mxu0 %v112
    %146 = vmatprep.subr.mxu0 0.0
    %147 = vmatpush1.xpose.msra.mxu0 0.0
    %148 = vmatprep.subr.mxu0 0.0
    %149 = vmatpush1.xpose.msra.mxu0 0.0
    %150 = vmatprep.subr.mxu0 0.0
    %151 = vmatpush1.xpose.msra.mxu0 0.0
    %152 = vmatprep.subr.mxu0 0.0
    %153 = vmatpush1.xpose.msra.mxu0 0.0
    %154 = vmatprep.subr.mxu0 0.0
    %155 = vmatpush1.xpose.msra.mxu0 0.0
    %156 = vmatprep.subr.mxu0 0.0
    %157 = vmatpush1.xpose.msra.mxu0 0.0
    %158 = vmatprep.subr.mxu0 0.0
    %159 = vmatpush1.xpose.msra.mxu0 0.0
    %160 = vmatprep.subr.mxu0 0.0
    %161 = vmatpush1.xpose.msra.mxu0 0.0
    %162 = vmatprep.subr.mxu0 0.0
    %163 = vmatpush1.xpose.msra.mxu0 0.0
    %164 = vmatprep.subr.mxu0 0.0
    %165 = vmatpush1.xpose.msra.mxu0 0.0
    %166 = vmatprep.subr.mxu0 0.0
    %167 = vmatpush1.xpose.msra.mxu0 0.0
    %168 = vmatprep.subr.mxu0 0.0
    %169 = vmatpush1.xpose.msra.mxu0 0.0
    %170 = vmatprep.subr.mxu0 0.0
    %171 = vmatpush1.xpose.msra.mxu0 0.0
    %172 = vmatprep.subr.mxu0 0.0
    %173 = vmatpush1.xpose.msra.mxu0 0.0
    %174 = vmatprep.subr.mxu0 0.0
    %175 = vmatpush1.xpose.msra.mxu0 0.0
    %176 = vmatprep.subr.mxu0 0.0
    %177 = vmatpush1.xpose.msra.mxu0 0.0
    %178 = vmatprep.mubr.f32.mxu0 0.0
    %179 = vmatmul.mubr.f32.gmra.mrb[0].mxu0 %v61
    %v180 = vpop.f32.mrb[0].mxu0
    %v181 = vadd.f32 %v52, %v180
    %v182 = vpop.f32.mrb[0].mxu0
    %183 = vmatprep.mubr.f32.mxu0 0.0
    %184 = vmatmul.mubr.f32.gmra.mrb[0].mxu0 %v64
    %v185 = vpop.f32.mrb[0].mxu0
    %v186 = vadd.f32 %v57, %v185
    %v187 = vpop.f32.mrb[0].mxu0
    %188 = vdwg.mxu0
    %v189 = vmax.f32 %v181, 0.0
    %v190 = vmax.f32 %v186, 0.0
    %v191 = vld [vmem:[%s3] sm:$0xff]
    %v192 = vld [vmem:[%s4] sm:$0xff]
    %194 = vset.pattern.permute.xlu0 0
    %195 = vperm.xlu0 %194, %v192
    %v196 = vpop.permute.xlu0 %195
    %vm198 = vcmask 130048
    %v200 = vsel %vm198, %v191, 0
    %202 = vmatprep.subr.mxu0 0.0
    %203 = vmatpush1.msra.mxu0 %v189
    %204 = vmatprep.subr.mxu0 0.0
    %205 = vmatpush1.msra.mxu0 %v190
    %206 = vmatprep.subr.mxu0 0.0
    %207 = vmatpush1.msra.mxu0 0.0
    %208 = vmatprep.subr.mxu0 0.0
    %209 = vmatpush1.msra.mxu0 0.0
    %210 = vmatprep.subr.mxu0 0.0
    %211 = vmatpush1.msra.mxu0 0.0
    %212 = vmatprep.subr.mxu0 0.0
    %213 = vmatpush1.msra.mxu0 0.0
    %214 = vmatprep.subr.mxu0 0.0
    %215 = vmatpush1.msra.mxu0 0.0
    %216 = vmatprep.subr.mxu0 0.0
    %217 = vmatpush1.msra.mxu0 0.0
    %218 = vmatprep.subr.mxu0 0.0
    %219 = vmatpush1.msra.mxu0 0.0
    %220 = vmatprep.subr.mxu0 0.0
    %221 = vmatpush1.msra.mxu0 0.0
    %222 = vmatprep.subr.mxu0 0.0
    %223 = vmatpush1.msra.mxu0 0.0
    %224 = vmatprep.subr.mxu0 0.0
    %225 = vmatpush1.msra.mxu0 0.0
    %226 = vmatprep.subr.mxu0 0.0
    %227 = vmatpush1.msra.mxu0 0.0
    %228 = vmatprep.subr.mxu0 0.0
    %229 = vmatpush1.msra.mxu0 0.0
    %230 = vmatprep.subr.mxu0 0.0
    %231 = vmatpush1.msra.mxu0 0.0
    %232 = vmatprep.subr.mxu0 0.0
    %233 = vmatpush1.msra.mxu0 0.0
    %234 = vmatprep.subr.mxu0 0.0
    %235 = vmatpush1.msra.mxu0 0.0
    %236 = vmatprep.subr.mxu0 0.0
    %237 = vmatpush1.msra.mxu0 0.0
    %238 = vmatprep.subr.mxu0 0.0
    %239 = vmatpush1.msra.mxu0 0.0
    %240 = vmatprep.subr.mxu0 0.0
    %241 = vmatpush1.msra.mxu0 0.0
    %242 = vmatprep.subr.mxu0 0.0
    %243 = vmatpush1.msra.mxu0 0.0
    %244 = vmatprep.subr.mxu0 0.0
    %245 = vmatpush1.msra.mxu0 0.0
    %246 = vmatprep.subr.mxu0 0.0
    %247 = vmatpush1.msra.mxu0 0.0
    %248 = vmatprep.subr.mxu0 0.0
    %249 = vmatpush1.msra.mxu0 0.0
    %250 = vmatprep.subr.mxu0 0.0
    %251 = vmatpush1.msra.mxu0 0.0
    %252 = vmatprep.subr.mxu0 0.0
    %253 = vmatpush1.msra.mxu0 0.0
    %254 = vmatprep.subr.mxu0 0.0
    %255 = vmatpush1.msra.mxu0 0.0
    %256 = vmatprep.subr.mxu0 0.0
    %257 = vmatpush1.msra.mxu0 0.0
    %258 = vmatprep.subr.mxu0 0.0
    %259 = vmatpush1.msra.mxu0 0.0
    %260 = vmatprep.subr.mxu0 0.0
    %261 = vmatpush1.msra.mxu0 0.0
    %262 = vmatprep.subr.mxu0 0.0
    %263 = vmatpush1.msra.mxu0 0.0
    %264 = vmatprep.subr.mxu0 0.0
    %265 = vmatpush1.msra.mxu0 0.0
    %266 = vmatprep.mubr.f32.mxu0 0.0
    %267 = vmatmul.mubr.f32.gmra.mrb[0].mxu0 %v200
    %v268 = vpop.f32.mrb[0].mxu0
    %v269 = vadd.f32 %v196, %v268
    %v270 = vpop.f32.mrb[0].mxu0
    %271 = vdwg.mxu0
    %v272 = vmax.f32 %v269, 0.0
    %v273 = vld [vmem:[%s5] sm:$0x1]
    %v274 = vld [vmem:[#allocation2] sm:$0x1]
    %276 = vset.pattern.permute.xlu0 0
    %277 = vperm.xlu0 %276, %v274
    %v278 = vpop.permute.xlu0 %277
    %v280 = vlaneseq
    %v281 = vshrl.u32 %v280, 7
    %v282 = vsub.s32 0, %v281
    %v283 = vrot.slane %v278, %v282
    %vm284 = vcmask 64512
    %v286 = vsel %vm284, %v273, 0
    %288 = vmatprep.subr.mxu0 0.0
    %289 = vmatpush1.msra.mxu0 %v272
    %290 = vmatprep.subr.mxu0 0.0
    %291 = vmatpush1.msra.mxu0 0.0
    %292 = vmatprep.subr.mxu0 0.0
    %293 = vmatpush1.msra.mxu0 0.0
    %294 = vmatprep.subr.mxu0 0.0
    %295 = vmatpush1.msra.mxu0 0.0
    %296 = vmatprep.subr.mxu0 0.0
    %297 = vmatpush1.msra.mxu0 0.0
    %298 = vmatprep.subr.mxu0 0.0
    %299 = vmatpush1.msra.mxu0 0.0
    %300 = vmatprep.subr.mxu0 0.0
    %301 = vmatpush1.msra.mxu0 0.0
    %302 = vmatprep.subr.mxu0 0.0
    %303 = vmatpush1.msra.mxu0 0.0
    %304 = vmatprep.subr.mxu0 0.0
    %305 = vmatpush1.msra.mxu0 0.0
    %306 = vmatprep.subr.mxu0 0.0
    %307 = vmatpush1.msra.mxu0 0.0
    %308 = vmatprep.subr.mxu0 0.0
    %309 = vmatpush1.msra.mxu0 0.0
    %310 = vmatprep.subr.mxu0 0.0
    %311 = vmatpush1.msra.mxu0 0.0
    %312 = vmatprep.subr.mxu0 0.0
    %313 = vmatpush1.msra.mxu0 0.0
    %314 = vmatprep.subr.mxu0 0.0
    %315 = vmatpush1.msra.mxu0 0.0
    %316 = vmatprep.subr.mxu0 0.0
    %317 = vmatpush1.msra.mxu0 0.0
    %318 = vmatprep.subr.mxu0 0.0
    %319 = vmatpush1.msra.mxu0 0.0
    %320 = vmatprep.subr.mxu0 0.0
    %321 = vmatpush1.msra.mxu0 0.0
    %322 = vmatprep.subr.mxu0 0.0
    %323 = vmatpush1.msra.mxu0 0.0
    %324 = vmatprep.subr.mxu0 0.0
    %325 = vmatpush1.msra.mxu0 0.0
    %326 = vmatprep.subr.mxu0 0.0
    %327 = vmatpush1.msra.mxu0 0.0
    %328 = vmatprep.subr.mxu0 0.0
    %329 = vmatpush1.msra.mxu0 0.0
    %330 = vmatprep.subr.mxu0 0.0
    %331 = vmatpush1.msra.mxu0 0.0
    %332 = vmatprep.subr.mxu0 0.0
    %333 = vmatpush1.msra.mxu0 0.0
    %334 = vmatprep.subr.mxu0 0.0
    %335 = vmatpush1.msra.mxu0 0.0
    %336 = vmatprep.subr.mxu0 0.0
    %337 = vmatpush1.msra.mxu0 0.0
    %338 = vmatprep.subr.mxu0 0.0
    %339 = vmatpush1.msra.mxu0 0.0
    %340 = vmatprep.subr.mxu0 0.0
    %341 = vmatpush1.msra.mxu0 0.0
    %342 = vmatprep.subr.mxu0 0.0
    %343 = vmatpush1.msra.mxu0 0.0
    %344 = vmatprep.subr.mxu0 0.0
    %345 = vmatpush1.msra.mxu0 0.0
    %346 = vmatprep.subr.mxu0 0.0
    %347 = vmatpush1.msra.mxu0 0.0
    %348 = vmatprep.subr.mxu0 0.0
    %349 = vmatpush1.msra.mxu0 0.0
    %350 = vmatprep.subr.mxu0 0.0
    %351 = vmatpush1.msra.mxu0 0.0
    %352 = vmatprep.mubr.f32.mxu0 0.0
    %353 = vmatmul.mubr.f32.gmra.mrb[0].mxu0 %v286
    %v354 = vpop.f32.mrb[0].mxu0
    %v355 = vadd.f32 %v283, %v354
    %v356 = vpop.f32.mrb[0].mxu0
    %357 = vdwg.mxu0
    %v358 = vxor.u32 %v355, 2147483648
    %v359 = vmul.f32 %v358, 1.442695
    %v360 = vpow.pop %v359
    %v361 = vadd.f32 %v360, 1.0
    %v362 = vrcp.pop %v361
    %v363 = vmul.f32 1.0, %v362
    %364 = vst [vmem:[#allocation3] sm:$0x1] %v363
    // Predicated region
    $region30: #{tpu_custom_call.1} parent=1 // pred_check
      _
    $region31: #{tpu_custom_call.1} parent=1 // pred_check_branch
      %366 = sbr.rel (0) target = $region33
    $region32: #{tpu_custom_call.1} parent=1 // pred_region
      %s368 = ssub.s32 16, 16
      %369 = vsyncadd [#allocation4], %s368
      %s371 = sshll.u32 [#allocation3], 4
      %s372 = int_to_ptr.vmem [resolvable:$true] %s371
      %374 = dma.vmem_to_hbm [thread:$0]  %s372, 16, %s7, [#allocation4]
    $region33: #{tpu_custom_call.1} parent=1 // pred_fallthru
      _
    // Predicated region
    $region34: #{tpu_custom_call.1} parent=1 // pred_check
      _
    $region35: #{tpu_custom_call.1} parent=1 // pred_check_branch
      %376 = sbr.rel (0) target = $region37
    $region36: #{tpu_custom_call.1} parent=1 // pred_region
      %377 = dma.done [#allocation4], 16
    $region37: #{tpu_custom_call.1} parent=1 // pred_fallthru
      _
    %378 = vsyncpa [#allocation4], 1

</llo_original>
